<compile_context>
chip_gen: v7x
topology: tpu7x:2x2x1
jax: 0.10.0
libtpu: 0.0.40
codegen_flags: <defaults>
</compile_context>

<pallas_src>
import functools

import jax
import jax.numpy as jnp
from jax.experimental import pallas as pl
from jax.experimental.pallas import tpu as pltpu


def _round_up(x, m):
    return ((x + m - 1) // m) * m


def _bce_rowmean_kernel(pred_ref, tgt_ref, out_ref, acc_ref, *, hw, tile_cols):
    """One (row-tile, spatial-tile) step of the streamed BCE-with-logits row mean.

    pred_ref / tgt_ref: (TR, TC) logits / labels (any dtype, upcast here)
    out_ref:            (TR, 1)  per-row mean BCE (written only at the last step)
    acc_ref:            (TR, 1)  f32 running sum over the spatial axis
    """
    h = pl.program_id(1)
    last = pl.num_programs(1) - 1

    @pl.when(h == 0)
    def _init():
        acc_ref[...] = jnp.zeros_like(acc_ref)

    x = pred_ref[...].astype(jnp.float32)
    y = tgt_ref[...].astype(jnp.float32)
    # Numerically stable BCE with logits:
    #   loss = max(x, 0) - x*y + log(1 + exp(-|x|))
    per_pixel = jnp.maximum(x, 0.0) - x * y + jnp.log1p(jnp.exp(-jnp.abs(x)))

    rem = hw % tile_cols  # static Python int
    if rem == 0:
        # Fast path: spatial axis divides evenly -> no masking anywhere.
        acc_ref[...] += jnp.sum(per_pixel, axis=-1, keepdims=True)
    else:
        # Only the last spatial tile is partial: mask its out-of-bounds lanes
        # (garbage from the clipped DMA) there and nowhere else.
        @pl.when(h != last)
        def _acc_full():
            acc_ref[...] += jnp.sum(per_pixel, axis=-1, keepdims=True)

        @pl.when(h == last)
        def _acc_tail():
            col = jax.lax.broadcasted_iota(jnp.int32, per_pixel.shape, 1)
            tail = jnp.where(col < rem, per_pixel, 0.0)
            acc_ref[...] += jnp.sum(tail, axis=-1, keepdims=True)

    @pl.when(h == last)
    def _finalize():
        out_ref[...] = acc_ref[...] * (1.0 / hw)


def _pick_tiles(bc, hw, pred_bytes, tgt_bytes, tile_rows, tile_cols):
    # Rows: aim for >= 2 blocks on the "parallel" axis (v7x megacore), cap 256.
    if tile_rows is None:
        tile_rows = min(256, _round_up(max(1, (bc + 1) // 2), 8))
    tile_rows = max(8, min(_round_up(tile_rows, 8), _round_up(bc, 8)))

    # Columns: stream ~8 MiB of input per grid step (amortizes per-step
    # pipeline overhead at HBM rate for any dtype mix).
    hw_cap = _round_up(hw, 128)
    if tile_cols is None:
        budget = 8 * 1024 * 1024
        bpe = pred_bytes + tgt_bytes
        tile_cols = max(512, (budget // (tile_rows * bpe)) // 128 * 128)
        tile_cols = min(tile_cols, 32768)
    tile_cols = max(128, min(_round_up(tile_cols, 128), hw_cap))
    return tile_rows, tile_cols


def weighted_channelwise_bce_loss(predictions, targets, custom_weights=None,
                                  reduction="mean", *, tile_rows=None,
                                  tile_cols=None):
    """JAX/Pallas equivalent of WeightedChannelwiseBCELoss.forward.

    predictions, targets: (B, C, H, W); custom_weights: optional (C,).
    Returns scalar for reduction='mean'/'sum', or (B, C) for 'none'.
    Predictions may be f32/bf16; targets may be f32/bf16/int8/uint8.
    """
    assert predictions.shape == targets.shape, (
        f"Predictions shape {predictions.shape} must match targets shape "
        f"{targets.shape}")
    B, C, H, W = predictions.shape
    BC, HW = B * C, H * W

    pred2 = predictions.reshape(BC, HW)
    tgt2 = targets.reshape(BC, HW)

    TR, TC = _pick_tiles(BC, HW, pred2.dtype.itemsize, tgt2.dtype.itemsize,
                         tile_rows, tile_cols)
    grid = (pl.cdiv(BC, TR), pl.cdiv(HW, TC))

    in_bytes = (pred2.size * pred2.dtype.itemsize +
                tgt2.size * tgt2.dtype.itemsize)
    cost = pl.CostEstimate(
        flops=6 * BC * HW,
        transcendentals=2 * BC * HW,
        bytes_accessed=in_bytes + BC * 4,
    )

    # Double-buffered input blocks + tiny output/scratch, with margin.  Raised
    # above v5e's 16 MiB scoped default; defaults stay <= 32 MiB (v7x-safe).
    bpe = pred2.dtype.itemsize + tgt2.dtype.itemsize
    vmem_need = 2 * TR * TC * bpe + 4 * TR * 4 + (1 << 20)
    vmem_limit_bytes = int(max(vmem_need, 32 << 20))

    row_means = pl.pallas_call(
        functools.partial(_bce_rowmean_kernel, hw=HW, tile_cols=TC),
        out_shape=jax.ShapeDtypeStruct((BC, 1), jnp.float32),
        grid_spec=pltpu.PrefetchScalarGridSpec(
            num_scalar_prefetch=0,
            grid=grid,
            in_specs=[
                pl.BlockSpec((TR, TC), lambda r, h: (r, h)),
                pl.BlockSpec((TR, TC), lambda r, h: (r, h)),
            ],
            out_specs=pl.BlockSpec((TR, 1), lambda r, h: (r, 0)),
            scratch_shapes=[pltpu.VMEM((TR, 1), jnp.float32)],
        ),
        compiler_params=pltpu.CompilerParams(
            dimension_semantics=("parallel", "arbitrary"),
            vmem_limit_bytes=vmem_limit_bytes),
        cost_estimate=cost,
    )(pred2, tgt2)

    channel_losses = row_means.reshape(B, C)            # per-(b, c) mean BCE

    if custom_weights is None:
        weights = jnp.ones((C,), jnp.float32)
    else:
        weights = custom_weights.astype(jnp.float32)
    weighted_losses = channel_losses * weights.reshape(1, C)

    if reduction == "mean":
        return weighted_losses.mean()
    elif reduction == "sum":
        return weighted_losses.sum()
    elif reduction == "none":
        return weighted_losses
    else:
        raise ValueError(f"Unknown reduction: {reduction}")


def _reference(predictions, targets, custom_weights=None, reduction="mean"):
    """Pure-JAX reference mirroring the PyTorch module."""
    x = predictions.astype(jnp.float32)
    y = targets.astype(jnp.float32)
    pixel = jnp.maximum(x, 0.0) - x * y + jnp.log1p(jnp.exp(-jnp.abs(x)))
    channel = pixel.mean(axis=(2, 3))                   # (B, C)
    C = channel.shape[1]
    w = jnp.ones((C,), jnp.float32) if custom_weights is None \
        else custom_weights.astype(jnp.float32)
    weighted = channel * w.reshape(1, -1)
    if reduction == "mean":
        return weighted.mean()
    if reduction == "sum":
        return weighted.sum()
    return weighted


if __name__ == "__main__":
    key = jax.random.PRNGKey(0)
    ok = True

    def _close(a, b):
        return bool(jnp.allclose(a, b, rtol=1e-5, atol=1e-5))

    # Case 1: basic small shape, exact tile fit, f32 inputs, all reductions.
    B, C, H, W = 2, 4, 16, 16
    k_pred, k_tgt, k_w = jax.random.split(key, 3)
    predictions = jax.random.normal(k_pred, (B, C, H, W), dtype=jnp.float32)
    targets = (jax.random.uniform(k_tgt, (B, C, H, W)) > 0.5).astype(jnp.float32)
    custom_weights = jnp.linspace(0.5, 2.0, C, dtype=jnp.float32)

    for reduction in ("mean", "sum", "none"):
        for w in (None, custom_weights):
            out = jax.block_until_ready(
                weighted_channelwise_bce_loss(predictions, targets, w, reduction))
            ref = _reference(predictions, targets, w, reduction)
            ok &= _close(out, ref)

    # Case 2: multi-tile spatial reduction (grid on HW axis), forced small tiles,
    # evenly dividing (fast unmasked path).
    B2, C2, H2, W2 = 2, 4, 32, 32
    k1, k2 = jax.random.split(k_w)
    p2 = jax.random.normal(k1, (B2, C2, H2, W2), dtype=jnp.float32)
    t2 = (jax.random.uniform(k2, (B2, C2, H2, W2)) > 0.5).astype(jnp.float32)
    out2 = jax.block_until_ready(
        weighted_channelwise_bce_loss(p2, t2, None, "none",
                                      tile_rows=8, tile_cols=256))
    ok &= _close(out2, _reference(p2, t2, None, "none"))

    # Case 3: partial row block AND partial spatial tile (last-tile mask path),
    # narrow dtypes (bf16 preds, uint8 targets).
    B3, C3, H3, W3 = 3, 3, 20, 20
    k3, k4 = jax.random.split(k1)
    p3 = jax.random.normal(k3, (B3, C3, H3, W3), dtype=jnp.float32).astype(jnp.bfloat16)
    t3 = (jax.random.uniform(k4, (B3, C3, H3, W3)) > 0.5).astype(jnp.uint8)
    w3 = jnp.linspace(0.25, 1.75, C3, dtype=jnp.float32)
    out3 = jax.block_until_ready(
        weighted_channelwise_bce_loss(p3, t3, w3, "mean",
                                      tile_rows=8, tile_cols=128))
    ref3 = _reference(p3.astype(jnp.float32), t3.astype(jnp.float32), w3, "mean")
    ok &= _close(out3, ref3)

    # Case 4: default (byte-budget) tiles on a shape that divides neither axis
    # (partial row block + masked spatial tail), f32.
    B4, C4, H4, W4 = 2, 6, 24, 24
    k5, k6 = jax.random.split(k3)
    p4 = jax.random.normal(k5, (B4, C4, H4, W4), dtype=jnp.float32)
    t4 = (jax.random.uniform(k6, (B4, C4, H4, W4)) > 0.5).astype(jnp.float32)
    out4 = jax.block_until_ready(
        weighted_channelwise_bce_loss(p4, t4, None, "sum"))
    ok &= _close(out4, _reference(p4, t4, None, "sum"))

    if ok:
        print("KERNEL_OK")
    else:
        print("KERNEL_MISMATCH")
</pallas_src>

<mosaic_0001>
module attributes {stable_mosaic.version = 11 : i64} {
  func.func @_bce_rowmean_kernel(%arg0: i32, %arg1: i32, %arg2: memref<8x256xf32, #tpu.memory_space<vmem>>, %arg3: memref<8x256xf32, #tpu.memory_space<vmem>>, %arg4: memref<8x1xf32, #tpu.memory_space<vmem>>, %arg5: memref<8x1xf32, #tpu.memory_space<vmem>>) attributes {dimension_semantics = [#tpu.dimension_semantics<parallel>, #tpu.dimension_semantics<arbitrary>], iteration_bounds = array<i64: 1, 1>, scalar_prefetch = 0 : i64, scratch_operands = 1 : i64, tpu.core_type = #tpu.core_type<tc>, window_params = [{transform_indices = @transform_0, window_bounds = array<i64: 8, 256>}, {transform_indices = @transform_1, window_bounds = array<i64: 8, 256>}, {transform_indices = @transform_2, window_bounds = array<i64: 8, 1>}]} {
    %c0_i32 = arith.constant 0 : i32
    %0 = arith.cmpi eq, %arg1, %c0_i32 : i32
    %1 = arith.extui %0 : i1 to i32
    %c0_i32_0 = arith.constant 0 : i32
    %2 = arith.cmpi ne, %1, %c0_i32_0 : i32
    scf.if %2 {
      %cst_12 = arith.constant 0.000000e+00 : f32
      %23 = vector.broadcast %cst_12 : f32 to vector<8x1xf32>
      %c0_13 = arith.constant 0 : index
      %c0_14 = arith.constant 0 : index
      %24 = vector.load %arg5[%c0_13, %c0_14] : memref<8x1xf32, #tpu.memory_space<vmem>>, vector<8x1xf32>
      tpu.vector_store %arg5[%c0_13, %c0_14], %23 {strides = array<i32>} : memref<8x1xf32, #tpu.memory_space<vmem>>, vector<8x1xf32>,
    } else {
    }
    %c0 = arith.constant 0 : index
    %c0_1 = arith.constant 0 : index
    %3 = vector.load %arg2[%c0, %c0_1] : memref<8x256xf32, #tpu.memory_space<vmem>>, vector<8x256xf32>
    %c0_2 = arith.constant 0 : index
    %c0_3 = arith.constant 0 : index
    %4 = vector.load %arg3[%c0_2, %c0_3] : memref<8x256xf32, #tpu.memory_space<vmem>>, vector<8x256xf32>
    %cst = arith.constant 0.000000e+00 : f32
    %5 = vector.broadcast %cst : f32 to vector<8x256xf32>
    %6 = arith.maximumf %3, %5 : vector<8x256xf32>
    %7 = arith.mulf %3, %4 : vector<8x256xf32>
    %8 = arith.subf %6, %7 : vector<8x256xf32>
    %9 = math.absf %3 : vector<8x256xf32>
    %cst_4 = arith.constant 0.000000e+00 : f32
    %10 = vector.broadcast %cst_4 : f32 to vector<8x256xf32>
    %11 = arith.subf %10, %9 : vector<8x256xf32>
    %12 = math.exp %11 : vector<8x256xf32>
    %13 = math.log1p %12 : vector<8x256xf32>
    %14 = arith.addf %8, %13 : vector<8x256xf32>
    %c0_5 = arith.constant 0 : index
    %c0_6 = arith.constant 0 : index
    %15 = vector.load %arg5[%c0_5, %c0_6] : memref<8x1xf32, #tpu.memory_space<vmem>>, vector<8x1xf32>
    %cst_7 = arith.constant dense<0.000000e+00> : vector<8xf32>
    %16 = vector.multi_reduction <add>, %14, %cst_7 [1] : vector<8x256xf32> to vector<8xf32>
    %17 = vector.shape_cast %16 : vector<8xf32> to vector<8x1xf32>
    %18 = arith.addf %15, %17 : vector<8x1xf32>
    %c0_8 = arith.constant 0 : index
    %c0_9 = arith.constant 0 : index
    %19 = vector.load %arg5[%c0_8, %c0_9] : memref<8x1xf32, #tpu.memory_space<vmem>>, vector<8x1xf32>
    tpu.vector_store %arg5[%c0_8, %c0_9], %18 {strides = array<i32>} : memref<8x1xf32, #tpu.memory_space<vmem>>, vector<8x1xf32>,
    %c0_i32_10 = arith.constant 0 : i32
    %20 = arith.cmpi eq, %arg1, %c0_i32_10 : i32
    %21 = arith.extui %20 : i1 to i32
    %c0_i32_11 = arith.constant 0 : i32
    %22 = arith.cmpi ne, %21, %c0_i32_11 : i32
    scf.if %22 {
      %c0_12 = arith.constant 0 : index
      %c0_13 = arith.constant 0 : index
      %23 = vector.load %arg5[%c0_12, %c0_13] : memref<8x1xf32, #tpu.memory_space<vmem>>, vector<8x1xf32>
      %cst_14 = arith.constant 3.906250e-03 : f32
      %24 = vector.broadcast %cst_14 : f32 to vector<8x1xf32>
      %25 = arith.mulf %23, %24 : vector<8x1xf32>
      %c0_15 = arith.constant 0 : index
      %c0_16 = arith.constant 0 : index
      %26 = vector.load %arg4[%c0_15, %c0_16] : memref<8x1xf32, #tpu.memory_space<vmem>>, vector<8x1xf32>
      tpu.vector_store %arg4[%c0_15, %c0_16], %25 {strides = array<i32>} : memref<8x1xf32, #tpu.memory_space<vmem>>, vector<8x1xf32>,
    } else {
    }
    return
  }
  func.func @transform_0(%arg0: i32, %arg1: i32) -> (i32, i32) {
    %c0_i32 = arith.constant 0 : i32
    return %arg0, %arg1 : i32, i32
  }
  func.func @transform_1(%arg0: i32, %arg1: i32) -> (i32, i32) {
    %c0_i32 = arith.constant 0 : i32
    return %arg0, %arg1 : i32, i32
  }
  func.func @transform_2(%arg0: i32, %arg1: i32) -> (i32, i32) {
    %c0_i32 = arith.constant 0 : i32
    %c0_i32_0 = arith.constant 0 : i32
    return %arg0, %c0_i32 : i32, i32
  }
}

</mosaic_0001>

<llo_original>
// kernel: tpu_custom_call.1
$region0: #{tpu_custom_call.1}
  #allocation0 [shape = 'u32[]', space=smem, size = 0x4, offset = 0x4, fixed_abs, tag = 'smem constant byte address 0x4 - core index']
  #allocation1 [shape = 'u32[144,128]{1,0:T(1,128)}', space=vmem, size = 0x12000, scoped, tag = 'internal scratch']
  #allocation2 [shape = 'f32[8,1]{1,0:T(8,128)}', space=vmem, size = 0x1000, scoped, tag = 'scratch operand']
  %s0 = inlined_call_operand.hbm [shape: f32[8,256], index: 0, kind: input, shape index: {}]
  %s1 = inlined_call_operand.hbm [shape: f32[8,256], index: 1, kind: input, shape index: {}]
  %s2 = inlined_call_operand.vmem [shape: f32[8,1], index: 2, kind: output, shape index: {}]
  %s3 = sld [smem:[#allocation0]]
  $region34: #{tpu_custom_call.1} parent=0
    _
  %s5 = ssub.s32 1, %s3
  %s6 = scalar_select 0, %s5, %s3
  $region1: #{tpu_custom_call.1} parent=0
    #allocation3 [shape = 'u8[8192]{0}', space=vmem, size = 0x2000, scoped, tag = 'input window, operand 0, single buffered']
    #allocation4 [shape = 's32[1]{0}', space=sflag, size = 0x4, scoped, tag = 'scoped memory for tpu_custom_call.1']
    #allocation5 [shape = 'u8[8192]{0}', space=vmem, size = 0x2000, scoped, tag = 'input window, operand 1, single buffered']
    #allocation6 [shape = 's32[1]{0}', space=sflag, size = 0x4, scoped, tag = 'scoped memory for tpu_custom_call.1']
    %7 = vsyncpa [#allocation4], 0
    %8 = vsyncpa [#allocation6], 0
    // Predicated region
    $region2: #{tpu_custom_call.1} parent=1 // pred_check
      _
    $region3: #{tpu_custom_call.1} parent=1 // pred_check_branch
      %10 = sbr.rel (0) target = $region5
    $region4: #{tpu_custom_call.1} parent=1 // pred_region
      %s12 = ssub.s32 256, 256
      %13 = vsyncadd [#allocation4], %s12
      %s15 = sshll.u32 [#allocation3], 4
      %s16 = int_to_ptr.vmem [resolvable:$true] %s15
      %18 = dma.hbm_to_vmem [thread:$0]  %s0, 256, %s16, [#allocation4]
    $region5: #{tpu_custom_call.1} parent=1 // pred_fallthru
      _
    // Predicated region
    $region6: #{tpu_custom_call.1} parent=1 // pred_check
      _
    $region7: #{tpu_custom_call.1} parent=1 // pred_check_branch
      %20 = sbr.rel (0) target = $region9
    $region8: #{tpu_custom_call.1} parent=1 // pred_region
      %s22 = ssub.s32 256, 256
      %23 = vsyncadd [#allocation6], %s22
      %s25 = sshll.u32 [#allocation5], 4
      %s26 = int_to_ptr.vmem [resolvable:$true] %s25
      %28 = dma.hbm_to_vmem [thread:$0]  %s1, 256, %s26, [#allocation6]
    $region9: #{tpu_custom_call.1} parent=1 // pred_fallthru
      _
    // Predicated region
    $region10: #{tpu_custom_call.1} parent=1 // pred_check
      _
    $region11: #{tpu_custom_call.1} parent=1 // pred_check_branch
      %30 = sbr.rel (0) target = $region13
    $region12: #{tpu_custom_call.1} parent=1 // pred_region
      %31 = dma.done [#allocation4], 256
    $region13: #{tpu_custom_call.1} parent=1 // pred_fallthru
      _
    // Predicated region
    $region14: #{tpu_custom_call.1} parent=1 // pred_check
      _
    $region15: #{tpu_custom_call.1} parent=1 // pred_check_branch
      %33 = sbr.rel (0) target = $region17
    $region16: #{tpu_custom_call.1} parent=1 // pred_region
      %34 = dma.done [#allocation6], 256
    $region17: #{tpu_custom_call.1} parent=1 // pred_fallthru
      _
    %p35 = scmp.eq.s32.totalorder 0, 0
    // Predicated region
    $region18: #{tpu_custom_call.1} parent=1 // pred_check
      %p36 = pneg %p35
    $region19: #{tpu_custom_call.1} parent=1 // pred_check_branch
      %38 = sbr.rel (%p36) target = $region21
    $region20: #{tpu_custom_call.1} parent=1 // pred_region
      %vm39 = vcmask 7168
      %40 = vst.msk [vmem:[#allocation2] sm:$0xff] %vm39, 0.0
    $region21: #{tpu_custom_call.1} parent=1 // pred_fallthru
      _
    %v41 = vld [vmem:[#allocation3] sm:$0xff]
    %v42 = vld [vmem:[#allocation3 + $0x8] sm:$0xff]
    %v43 = vld [vmem:[#allocation5] sm:$0xff]
    %v44 = vld [vmem:[#allocation5 + $0x8] sm:$0xff]
    %v45 = vmax.f32 %v41, 0.0
    %v46 = vmax.f32 %v42, 0.0
    %v47 = vmul.f32 %v41, %v43
    %v48 = vmul.f32 %v42, %v44
    %v49 = vsub.f32 %v45, %v47
    %v50 = vsub.f32 %v46, %v48
    %v51 = vand.u32 2147483647, %v41
    %v52 = vand.u32 2147483647, %v42
    %v53 = vsub.f32 0.0, %v51
    %v54 = vsub.f32 0.0, %v52
    %v55 = vmul.f32 %v53, 1.442695
    %v56 = vpow.pop %v55
    %v57 = vmul.f32 %v54, 1.442695
    %v58 = vpow.pop %v57
    %v59 = vadd.f32 %v56, 1.0
    %v60 = vlog2.pop %v59
    %v61 = vmul.f32 %v60, 0.6931472
    %v62 = vmul.f32 -0.5, %v56
    %v63 = vadd.f32 %v62, 1.0
    %v64 = vmul.f32 %v63, %v56
    %v65 = vand.u32 2147483647, %v56
    %vm66 = vcmp.lt.f32.partialorder %v65, 0.0004427343
    %v67 = vsel %vm66, %v64, %v61
    %v68 = vadd.f32 %v58, 1.0
    %v69 = vlog2.pop %v68
    %v70 = vmul.f32 %v69, 0.6931472
    %v71 = vmul.f32 -0.5, %v58
    %v72 = vadd.f32 %v71, 1.0
    %v73 = vmul.f32 %v72, %v58
    %v74 = vand.u32 2147483647, %v58
    %vm75 = vcmp.lt.f32.partialorder %v74, 0.0004427343
    %v76 = vsel %vm75, %v73, %v70
    %v77 = vadd.f32 %v49, %v67
    %v78 = vadd.f32 %v50, %v76
    %v79 = vld [vmem:[#allocation2] sm:$0xff]
    %v80 = vadd.f32 %v77, %v78
    %81 = vadd.xlane.f32.xlu0 %v80
    %v82 = vpop.xlane.xlu0 %81
    %v83 = vadd.f32 %v79, %v82
    %vm84 = vcmask 7168
    %85 = vst.msk [vmem:[#allocation2] sm:$0xff] %vm84, %v83
    // Predicated region
    $region22: #{tpu_custom_call.1} parent=1 // pred_check
      %p86 = pneg %p35
    $region23: #{tpu_custom_call.1} parent=1 // pred_check_branch
      %88 = sbr.rel (%p86) target = $region25
    $region24: #{tpu_custom_call.1} parent=1 // pred_region
      %v89 = vld [vmem:[#allocation2] sm:$0xff]
      %v90 = vmul.f32 %v89, 0.00390625
      %91 = vst.msk [vmem:[%s2] sm:$0xff] %vm84, %v90
    $region25: #{tpu_custom_call.1} parent=1 // pred_fallthru
      _
    // Predicated region
    $region26: #{tpu_custom_call.1} parent=1 // pred_check
      _
    $region27: #{tpu_custom_call.1} parent=1 // pred_check_branch
      %93 = sbr.rel (0) target = $region29
    $region28: #{tpu_custom_call.1} parent=1 // pred_region
      _
    $region29: #{tpu_custom_call.1} parent=1 // pred_fallthru
      _
    // Predicated region
    $region30: #{tpu_custom_call.1} parent=1 // pred_check
      _
    $region31: #{tpu_custom_call.1} parent=1 // pred_check_branch
      %95 = sbr.rel (0) target = $region33
    $region32: #{tpu_custom_call.1} parent=1 // pred_region
      _
    $region33: #{tpu_custom_call.1} parent=1 // pred_fallthru
      _
    %96 = vsyncpa [#allocation4], 1
    %97 = vsyncpa [#allocation6], 1

</llo_original>
